<compile_context>
chip_gen: v5e
topology: v5e:2x2
jax: 0.10.0
libtpu: 0.0.40
codegen_flags: <defaults>
</compile_context>

<pallas_src>
import functools

import jax
import jax.numpy as jnp
from jax.experimental import pallas as pl
from jax.experimental.pallas import tpu as pltpu

_STD_EPSILON = 0.01
_MIN_STD = 1e-5
_HP = jax.lax.Precision.HIGHEST


def _elu(x):
    # ELU (alpha=1).  Negative branch: exp(z) - 1 with z = min(x, 0) <= 0.
    # Single EUP push per element; the tiny cancellation near z ~ 0 is far
    # below the accuracy we need (ELU ~ x there anyway).
    z = jnp.minimum(x, 0.0)
    return jnp.where(x > 0, x, jnp.exp(z) - 1.0)


def _softplus(x):
    # Numerically stable softplus (matches F.softplus to f32 rounding).
    return jnp.maximum(x, 0.0) + jnp.log(1.0 + jnp.exp(-jnp.abs(x)))


def value_model_kernel(x_ref, w1_ref, b1_ref, w2_ref, b2_ref, w3_ref, b3_ref,
                       out_ref):
    """One row tile.  x_ref: (TM, D) row-major; compute is feature-major."""
    x = x_ref[...]                                                  # (TM, D)
    # Contract over the feature axis of both operands -> (H, TM): rows end up
    # on the lane axis without any host-side transpose of the input.
    h = jax.lax.dot_general(
        w1_ref[...], x, (((1,), (1,)), ((), ())),
        preferred_element_type=jnp.float32, precision=_HP)          # (H, TM)
    h = _elu(h + b1_ref[...])
    h = jnp.dot(w2_ref[...], h,
                preferred_element_type=jnp.float32, precision=_HP)  # (H, TM)
    h = _elu(h + b2_ref[...])
    out = jnp.dot(w3_ref[...], h,
                  preferred_element_type=jnp.float32, precision=_HP)  # (2, TM)
    out = out + b3_ref[...]
    # Row 0 = mean (identity); row 1 = var = softplus(. + eps) + min_std.
    out_ref[0:1, :] = out[0:1, :]
    out_ref[1:2, :] = _softplus(out[1:2, :] + _STD_EPSILON) + _MIN_STD


def _pick_row_tile(n_rows, block_rows):
    """Row tile: equal to N for tiny inputs, otherwise a multiple of 128
    (lane-dense output stores) capped at block_rows; the ragged last tile is
    masked by Pallas automatically."""
    if n_rows <= 128:
        return n_rows
    block_rows = max(128, (block_rows // 128) * 128)
    return min(block_rows, (n_rows // 128) * 128)


@functools.partial(jax.jit, static_argnames=("block_rows",))
def value_model_forward(states, params, *, block_rows=8192):
    """states: (B, T, in_size) f32 -> (mean, var), each (B, T, 1) f32."""
    B, T, D = states.shape
    N = B * T
    w1, b1, w2, b2, w3, b3 = params          # w: (out, in), b: (out, 1)
    H = w1.shape[0]

    x2d = states.reshape(N, D).astype(jnp.float32)   # free reshape, no copy

    TM = _pick_row_tile(N, block_rows)
    n_tiles = pl.cdiv(N, TM)

    out = pl.pallas_call(
        value_model_kernel,
        out_shape=jax.ShapeDtypeStruct((2, N), jnp.float32),
        grid=(n_tiles,),
        in_specs=[
            pl.BlockSpec((TM, D), lambda i: (i, 0)),    # streamed row tiles
            pl.BlockSpec((H, D), lambda i: (0, 0)),     # VMEM-resident weights
            pl.BlockSpec((H, 1), lambda i: (0, 0)),
            pl.BlockSpec((H, H), lambda i: (0, 0)),
            pl.BlockSpec((H, 1), lambda i: (0, 0)),
            pl.BlockSpec((2, H), lambda i: (0, 0)),
            pl.BlockSpec((2, 1), lambda i: (0, 0)),
        ],
        out_specs=pl.BlockSpec((2, TM), lambda i: (0, i)),  # lane-dense slab
        compiler_params=pltpu.CompilerParams(
            dimension_semantics=("parallel",),          # megacore on v7x
            vmem_limit_bytes=32 * 1024 * 1024,          # ample headroom, all gens
        ),
    )(x2d, w1, b1, w2, b2, w3, b3)

    mean = out[0].reshape(B, T, 1)
    var = out[1].reshape(B, T, 1)
    return mean, var


def init_params(key, in_size, hidden_size):
    """nn.Linear-style init (uniform +-1/sqrt(fan_in)).  Weights stored as
    (out_features, in_features) — PyTorch's native layout, exactly what the
    feature-major kernel consumes — with biases as (out_features, 1)."""
    ks = jax.random.split(key, 6)

    def lin(kw, kb, fan_in, fan_out):
        bound = fan_in ** -0.5
        w = jax.random.uniform(kw, (fan_out, fan_in), jnp.float32, -bound, bound)
        b = jax.random.uniform(kb, (fan_out, 1), jnp.float32, -bound, bound)
        return w, b

    w1, b1 = lin(ks[0], ks[1], in_size, hidden_size)
    w2, b2 = lin(ks[2], ks[3], hidden_size, hidden_size)
    w3, b3 = lin(ks[4], ks[5], hidden_size, 2)
    return (w1, b1, w2, b2, w3, b3)


def _reference(states, params):
    """Plain-JAX reference of PyTorch ValueModel.forward (f32, HIGHEST)."""
    w1, b1, w2, b2, w3, b3 = params
    h = jax.nn.elu(jnp.dot(states, w1.T, precision=_HP) + b1[:, 0])
    h = jax.nn.elu(jnp.dot(h, w2.T, precision=_HP) + b2[:, 0])
    out = jnp.dot(h, w3.T, precision=_HP) + b3[:, 0]
    mean = out[..., 0:1]
    var = jax.nn.softplus(out[..., 1:2] + _STD_EPSILON) + _MIN_STD
    return mean, var


if __name__ == "__main__":
    in_size = 32
    hidden_size = 32
    B, T = 2, 8                      # (batch, horizon) leading dims

    key = jax.random.PRNGKey(0)
    k_states, k_params = jax.random.split(key)
    states = jax.random.normal(k_states, (B, T, in_size), dtype=jnp.float32)
    params = init_params(k_params, in_size, hidden_size)

    mean, var = value_model_forward(states, params)
    jax.block_until_ready((mean, var))

    ref_mean, ref_var = _reference(states, params)

    assert mean.shape == (B, T, 1) and var.shape == (B, T, 1)
    assert jnp.allclose(mean, ref_mean, atol=1e-4, rtol=1e-4)
    assert jnp.allclose(var, ref_var, atol=1e-4, rtol=1e-4)

    print("KERNEL_OK")
</pallas_src>

<mosaic_0001>
module attributes {stable_mosaic.version = 11 : i64} {
  func.func @value_model_kernel(%arg0: i32, %arg1: memref<16x32xf32, #tpu.memory_space<vmem>>, %arg2: memref<32x32xf32, #tpu.memory_space<vmem>>, %arg3: memref<32x1xf32, #tpu.memory_space<vmem>>, %arg4: memref<32x32xf32, #tpu.memory_space<vmem>>, %arg5: memref<32x1xf32, #tpu.memory_space<vmem>>, %arg6: memref<2x32xf32, #tpu.memory_space<vmem>>, %arg7: memref<2x1xf32, #tpu.memory_space<vmem>>, %arg8: memref<2x16xf32, #tpu.memory_space<vmem>>) attributes {dimension_semantics = [#tpu.dimension_semantics<parallel>], iteration_bounds = array<i64: 1>, scalar_prefetch = 0 : i64, scratch_operands = 0 : i64, tpu.core_type = #tpu.core_type<tc>, window_params = [{transform_indices = @transform_0, window_bounds = array<i64: 16, 32>}, {pipeline_mode = #tpu.pipeline_mode<synchronous>, transform_indices = @transform_1, window_bounds = array<i64: 32, 32>}, {pipeline_mode = #tpu.pipeline_mode<synchronous>, transform_indices = @transform_2, window_bounds = array<i64: 32, 1>}, {pipeline_mode = #tpu.pipeline_mode<synchronous>, transform_indices = @transform_3, window_bounds = array<i64: 32, 32>}, {pipeline_mode = #tpu.pipeline_mode<synchronous>, transform_indices = @transform_4, window_bounds = array<i64: 32, 1>}, {pipeline_mode = #tpu.pipeline_mode<synchronous>, transform_indices = @transform_5, window_bounds = array<i64: 2, 32>}, {pipeline_mode = #tpu.pipeline_mode<synchronous>, transform_indices = @transform_6, window_bounds = array<i64: 2, 1>}, {transform_indices = @transform_7, window_bounds = array<i64: 2, 16>}]} {
    %c0 = arith.constant 0 : index
    %c0_0 = arith.constant 0 : index
    %0 = vector.load %arg1[%c0, %c0_0] : memref<16x32xf32, #tpu.memory_space<vmem>>, vector<16x32xf32>
    %c0_1 = arith.constant 0 : index
    %c0_2 = arith.constant 0 : index
    %1 = vector.load %arg2[%c0_1, %c0_2] : memref<32x32xf32, #tpu.memory_space<vmem>>, vector<32x32xf32>
    %cst = arith.constant dense<0.000000e+00> : vector<32x16xf32>
    %2 = tpu.matmul %1, %0, %cst {dimension_numbers = #tpu.dot_dimension_numbers<[1], [1], [0], [0], [0, 0, 1, 0], [], []>, precision = #tpu.contract_precision<fp32>} : vector<32x32xf32>, vector<16x32xf32>, vector<32x16xf32> -> vector<32x16xf32>
    %c0_3 = arith.constant 0 : index
    %c0_4 = arith.constant 0 : index
    %3 = vector.load %arg3[%c0_3, %c0_4] : memref<32x1xf32, #tpu.memory_space<vmem>>, vector<32x1xf32>
    %4 = vector.broadcast %3 : vector<32x1xf32> to vector<32x16xf32>
    %5 = arith.addf %2, %4 : vector<32x16xf32>
    %cst_5 = arith.constant 0.000000e+00 : f32
    %6 = vector.broadcast %cst_5 : f32 to vector<32x16xf32>
    %7 = arith.minimumf %5, %6 : vector<32x16xf32>
    %cst_6 = arith.constant 0.000000e+00 : f32
    %8 = vector.broadcast %cst_6 : f32 to vector<32x16xf32>
    %9 = arith.cmpf ogt, %5, %8 : vector<32x16xf32>
    %10 = math.exp %7 : vector<32x16xf32>
    %cst_7 = arith.constant 1.000000e+00 : f32
    %11 = vector.broadcast %cst_7 : f32 to vector<32x16xf32>
    %12 = arith.subf %10, %11 : vector<32x16xf32>
    %13 = arith.select %9, %5, %12 : vector<32x16xi1>, vector<32x16xf32>
    %c0_8 = arith.constant 0 : index
    %c0_9 = arith.constant 0 : index
    %14 = vector.load %arg4[%c0_8, %c0_9] : memref<32x32xf32, #tpu.memory_space<vmem>>, vector<32x32xf32>
    %cst_10 = arith.constant dense<0.000000e+00> : vector<32x16xf32>
    %15 = tpu.matmul %14, %13, %cst_10 {dimension_numbers = #tpu.dot_dimension_numbers<[1], [0], [0], [1], [0, 0, 1, 1], [], []>, precision = #tpu.contract_precision<fp32>} : vector<32x32xf32>, vector<32x16xf32>, vector<32x16xf32> -> vector<32x16xf32>
    %c0_11 = arith.constant 0 : index
    %c0_12 = arith.constant 0 : index
    %16 = vector.load %arg5[%c0_11, %c0_12] : memref<32x1xf32, #tpu.memory_space<vmem>>, vector<32x1xf32>
    %17 = vector.broadcast %16 : vector<32x1xf32> to vector<32x16xf32>
    %18 = arith.addf %15, %17 : vector<32x16xf32>
    %cst_13 = arith.constant 0.000000e+00 : f32
    %19 = vector.broadcast %cst_13 : f32 to vector<32x16xf32>
    %20 = arith.minimumf %18, %19 : vector<32x16xf32>
    %cst_14 = arith.constant 0.000000e+00 : f32
    %21 = vector.broadcast %cst_14 : f32 to vector<32x16xf32>
    %22 = arith.cmpf ogt, %18, %21 : vector<32x16xf32>
    %23 = math.exp %20 : vector<32x16xf32>
    %cst_15 = arith.constant 1.000000e+00 : f32
    %24 = vector.broadcast %cst_15 : f32 to vector<32x16xf32>
    %25 = arith.subf %23, %24 : vector<32x16xf32>
    %26 = arith.select %22, %18, %25 : vector<32x16xi1>, vector<32x16xf32>
    %c0_16 = arith.constant 0 : index
    %c0_17 = arith.constant 0 : index
    %27 = vector.load %arg6[%c0_16, %c0_17] : memref<2x32xf32, #tpu.memory_space<vmem>>, vector<2x32xf32>
    %cst_18 = arith.constant dense<0.000000e+00> : vector<2x16xf32>
    %28 = tpu.matmul %27, %26, %cst_18 {dimension_numbers = #tpu.dot_dimension_numbers<[1], [0], [0], [1], [0, 0, 1, 1], [], []>, precision = #tpu.contract_precision<fp32>} : vector<2x32xf32>, vector<32x16xf32>, vector<2x16xf32> -> vector<2x16xf32>
    %c0_19 = arith.constant 0 : index
    %c0_20 = arith.constant 0 : index
    %29 = vector.load %arg7[%c0_19, %c0_20] : memref<2x1xf32, #tpu.memory_space<vmem>>, vector<2x1xf32>
    %30 = vector.broadcast %29 : vector<2x1xf32> to vector<2x16xf32>
    %31 = arith.addf %28, %30 : vector<2x16xf32>
    %32 = vector.extract_strided_slice %31 {offsets = [0, 0], sizes = [1, 16], strides = [1, 1]} : vector<2x16xf32> to vector<1x16xf32>
    %c0_21 = arith.constant 0 : index
    %c0_22 = arith.constant 0 : index
    %33 = vector.load %arg8[%c0_21, %c0_22] : memref<2x16xf32, #tpu.memory_space<vmem>>, vector<1x16xf32>
    tpu.vector_store %arg8[%c0_21, %c0_22], %32 {strides = array<i32>} : memref<2x16xf32, #tpu.memory_space<vmem>>, vector<1x16xf32>,
    %34 = vector.extract_strided_slice %31 {offsets = [1, 0], sizes = [1, 16], strides = [1, 1]} : vector<2x16xf32> to vector<1x16xf32>
    %cst_23 = arith.constant 0.00999999977 : f32
    %35 = vector.broadcast %cst_23 : f32 to vector<1x16xf32>
    %36 = arith.addf %34, %35 : vector<1x16xf32>
    %cst_24 = arith.constant 0.000000e+00 : f32
    %37 = vector.broadcast %cst_24 : f32 to vector<1x16xf32>
    %38 = arith.maximumf %36, %37 : vector<1x16xf32>
    %39 = math.absf %36 : vector<1x16xf32>
    %cst_25 = arith.constant 0.000000e+00 : f32
    %40 = vector.broadcast %cst_25 : f32 to vector<1x16xf32>
    %41 = arith.subf %40, %39 : vector<1x16xf32>
    %42 = math.exp %41 : vector<1x16xf32>
    %cst_26 = arith.constant 1.000000e+00 : f32
    %43 = vector.broadcast %cst_26 : f32 to vector<1x16xf32>
    %44 = arith.addf %43, %42 : vector<1x16xf32>
    %45 = math.log %44 : vector<1x16xf32>
    %46 = arith.addf %38, %45 : vector<1x16xf32>
    %cst_27 = arith.constant 9.99999974E-6 : f32
    %47 = vector.broadcast %cst_27 : f32 to vector<1x16xf32>
    %48 = arith.addf %46, %47 : vector<1x16xf32>
    %c1 = arith.constant 1 : index
    %c0_28 = arith.constant 0 : index
    %49 = vector.load %arg8[%c1, %c0_28] : memref<2x16xf32, #tpu.memory_space<vmem>>, vector<1x16xf32>
    tpu.vector_store %arg8[%c1, %c0_28], %48 {strides = array<i32>} : memref<2x16xf32, #tpu.memory_space<vmem>>, vector<1x16xf32>,
    return
  }
  func.func @transform_0(%arg0: i32) -> (i32, i32) {
    %c0_i32 = arith.constant 0 : i32
    %c0_i32_0 = arith.constant 0 : i32
    return %arg0, %c0_i32 : i32, i32
  }
  func.func @transform_1(%arg0: i32) -> (i32, i32) {
    %c0_i32 = arith.constant 0 : i32
    %c0_i32_0 = arith.constant 0 : i32
    %c0_i32_1 = arith.constant 0 : i32
    return %c0_i32, %c0_i32_0 : i32, i32
  }
  func.func @transform_2(%arg0: i32) -> (i32, i32) {
    %c0_i32 = arith.constant 0 : i32
    %c0_i32_0 = arith.constant 0 : i32
    %c0_i32_1 = arith.constant 0 : i32
    return %c0_i32, %c0_i32_0 : i32, i32
  }
  func.func @transform_3(%arg0: i32) -> (i32, i32) {
    %c0_i32 = arith.constant 0 : i32
    %c0_i32_0 = arith.constant 0 : i32
    %c0_i32_1 = arith.constant 0 : i32
    return %c0_i32, %c0_i32_0 : i32, i32
  }
  func.func @transform_4(%arg0: i32) -> (i32, i32) {
    %c0_i32 = arith.constant 0 : i32
    %c0_i32_0 = arith.constant 0 : i32
    %c0_i32_1 = arith.constant 0 : i32
    return %c0_i32, %c0_i32_0 : i32, i32
  }
  func.func @transform_5(%arg0: i32) -> (i32, i32) {
    %c0_i32 = arith.constant 0 : i32
    %c0_i32_0 = arith.constant 0 : i32
    %c0_i32_1 = arith.constant 0 : i32
    return %c0_i32, %c0_i32_0 : i32, i32
  }
  func.func @transform_6(%arg0: i32) -> (i32, i32) {
    %c0_i32 = arith.constant 0 : i32
    %c0_i32_0 = arith.constant 0 : i32
    %c0_i32_1 = arith.constant 0 : i32
    return %c0_i32, %c0_i32_0 : i32, i32
  }
  func.func @transform_7(%arg0: i32) -> (i32, i32) {
    %c0_i32 = arith.constant 0 : i32
    %c0_i32_0 = arith.constant 0 : i32
    return %c0_i32, %arg0 : i32, i32
  }
}

</mosaic_0001>

<llo_original>
// kernel: squeeze.3
$region0: #{squeeze.3}
  %s0 = inlined_call_operand.vmem [shape: f32[16], index: 0, kind: input, shape index: {}]
  %s1 = inlined_call_operand.hbm [shape: f32[2,8,1], index: 1, kind: output, shape index: {}]
  $region1: #{squeeze.3} parent=0
    #allocation0 [shape = 'u8[1024]{0}', space=vmem, size = 0x400, scoped, tag = 'operand span for operand 1']
    #allocation1 [shape = 's32[1]{0}', space=sflag, size = 0x4, scoped, tag = 'scoped memory for squeeze.3']
    #allocation2 [shape = 'u8[4096]{0}', space=vmem, size = 0x1000, scoped, tag = 'scoped mem for output reshape']
    #allocation3 [shape = 'u8[4096]{0}', space=vmem, size = 0x1000, scoped, tag = 'scoped mem for input reshape']
    %2 = vsyncpa [#allocation1], 0
    %s4 = ssub.s32 2, 1
    %v5 = vld [vmem:[%s0] sm:%s4]
    %6 = vst [vmem:[#allocation3] sm:%s4] %v5
    %v7 = vld [vmem:[#allocation3] sm:$0x1]
    %vm8 = vcmask 64512
    %9 = vst.msk [vmem:[#allocation2] sm:$0x1] %vm8, %v7
    %v10 = vld [vmem:[#allocation3] sm:$0x1]
    %11 = vrot.lane.b32.xlu0 %v10, 120
    %v12 = vpop.permute.xlu0 %11
    %vm13 = vcmask 64512
    %s14 = scalar_lea.vmem [#allocation2], 1
    %15 = vst.msk [vmem:[%s14] sm:$0x1] %vm13, %v12
    %s17 = ssub.s32 4, 1
    %v18 = vld [vmem:[#allocation2] sm:%s17]
    %s20 = ssub.s32 4, 1
    %21 = vst [vmem:[#allocation0] sm:%s20] %v18
    %23 = vsyncadd [#allocation1], 0
    %s25 = sshll.u32 [#allocation0], 4
    %s26 = int_to_ptr.vmem [resolvable:$true] %s25
    %s27 = sshll.u32 %s1, 4
    %s28 = int_to_ptr.hbm [resolvable:$true] %s27
    %30 = dma.vmem_to_hbm [thread:$0]  %s26, 32, %s28, [#allocation1]
    %32 = dma.done [#allocation1], 32
    %33 = vsyncpa [#allocation1], 1

// kernel: value_model_forward.1
$region0: #{value_model_forward.1}
  #allocation0 [shape = 'u32[]', space=smem, size = 0x4, offset = 0x4, fixed_abs, tag = 'smem constant byte address 0x4 - core index']
  #allocation1 [shape = 'u32[72,128]{1,0:T(1,128)}', space=vmem, size = 0x9000, scoped, tag = 'internal scratch']
  %s0 = inlined_call_operand.hbm [shape: f32[16,32], index: 0, kind: input, shape index: {}]
  %s1 = inlined_call_operand.vmem [shape: f32[32,32], index: 1, kind: input, shape index: {}]
  %s2 = inlined_call_operand.vmem [shape: f32[32,1], index: 2, kind: input, shape index: {}]
  %s3 = inlined_call_operand.vmem [shape: f32[32,32], index: 3, kind: input, shape index: {}]
  %s4 = inlined_call_operand.vmem [shape: f32[32,1], index: 4, kind: input, shape index: {}]
  %s5 = inlined_call_operand.vmem [shape: f32[2,32], index: 5, kind: input, shape index: {}]
  %s6 = inlined_call_operand.vmem [shape: f32[2,1], index: 6, kind: input, shape index: {}]
  %s7 = inlined_call_operand.vmem [shape: f32[2,16], index: 7, kind: output, shape index: {}]
  %s8 = sld [smem:[#allocation0]]
  $region42: #{value_model_forward.1} parent=0
    _
  %s10 = ssub.s32 1, %s8
  %s11 = scalar_select 0, %s10, %s8
  $region1: #{value_model_forward.1} parent=0
    #allocation2 [shape = 'u8[8192]{0}', space=vmem, size = 0x2000, scoped, tag = 'input window, operand 0, single buffered']
    #allocation3 [shape = 's32[1]{0}', space=sflag, size = 0x4, scoped, tag = 'scoped memory for value_model_forward.1']
    %12 = vsyncpa [#allocation3], 0
    // Predicated region
    $region2: #{value_model_forward.1} parent=1 // pred_check
      _
    $region3: #{value_model_forward.1} parent=1 // pred_check_branch
      %14 = sbr.rel (0) target = $region5
    $region4: #{value_model_forward.1} parent=1 // pred_region
      %16 = vsyncadd [#allocation3], 0
      %s17 = sshll.u32 %s0, 4
      %s18 = int_to_ptr.hbm [resolvable:$true] %s17
      %s19 = sshll.u32 [#allocation2], 4
      %s20 = int_to_ptr.vmem [resolvable:$true] %s19
      %25 = dma.hbm_to_vmem [thread:$0]  %s18, 256, %s20, [#allocation3], 128, 128, 8
    $region5: #{value_model_forward.1} parent=1 // pred_fallthru
      _
    // Predicated region
    $region6: #{value_model_forward.1} parent=1 // pred_check
      _
    $region7: #{value_model_forward.1} parent=1 // pred_check_branch
      %27 = sbr.rel (0) target = $region9
    $region8: #{value_model_forward.1} parent=1 // pred_region
      _
    $region9: #{value_model_forward.1} parent=1 // pred_fallthru
      _
    // Predicated region
    $region10: #{value_model_forward.1} parent=1 // pred_check
      _
    $region11: #{value_model_forward.1} parent=1 // pred_check_branch
      %29 = sbr.rel (0) target = $region13
    $region12: #{value_model_forward.1} parent=1 // pred_region
      _
    $region13: #{value_model_forward.1} parent=1 // pred_fallthru
      _
    // Predicated region
    $region14: #{value_model_forward.1} parent=1 // pred_check
      _
    $region15: #{value_model_forward.1} parent=1 // pred_check_branch
      %31 = sbr.rel (0) target = $region17
    $region16: #{value_model_forward.1} parent=1 // pred_region
      _
    $region17: #{value_model_forward.1} parent=1 // pred_fallthru
      _
    // Predicated region
    $region18: #{value_model_forward.1} parent=1 // pred_check
      _
    $region19: #{value_model_forward.1} parent=1 // pred_check_branch
      %33 = sbr.rel (0) target = $region21
    $region20: #{value_model_forward.1} parent=1 // pred_region
      _
    $region21: #{value_model_forward.1} parent=1 // pred_fallthru
      _
    // Predicated region
    $region22: #{value_model_forward.1} parent=1 // pred_check
      _
    $region23: #{value_model_forward.1} parent=1 // pred_check_branch
      %35 = sbr.rel (0) target = $region25
    $region24: #{value_model_forward.1} parent=1 // pred_region
      _
    $region25: #{value_model_forward.1} parent=1 // pred_fallthru
      _
    // Predicated region
    $region26: #{value_model_forward.1} parent=1 // pred_check
      _
    $region27: #{value_model_forward.1} parent=1 // pred_check_branch
      %37 = sbr.rel (0) target = $region29
    $region28: #{value_model_forward.1} parent=1 // pred_region
      _
    $region29: #{value_model_forward.1} parent=1 // pred_fallthru
      _
    // Predicated region
    $region30: #{value_model_forward.1} parent=1 // pred_check
      _
    $region31: #{value_model_forward.1} parent=1 // pred_check_branch
      %39 = sbr.rel (0) target = $region33
    $region32: #{value_model_forward.1} parent=1 // pred_region
      %41 = dma.done [#allocation3], 256
    $region33: #{value_model_forward.1} parent=1 // pred_fallthru
      _
    %v42 = vld [vmem:[#allocation2] sm:$0xff]
    %v43 = vld [vmem:[#allocation2 + $0x8] sm:$0xff]
    %v44 = vld [vmem:[%s1] sm:$0xff]
    %v45 = vld [vmem:[%s1 + $0x8] sm:$0xff]
    %v46 = vld [vmem:[%s1 + $0x10] sm:$0xff]
    %v47 = vld [vmem:[%s1 + $0x18] sm:$0xff]
    %v48 = vld [vmem:[%s2] sm:$0xff]
    %v49 = vld [vmem:[%s2 + $0x8] sm:$0xff]
    %v50 = vld [vmem:[%s2 + $0x10] sm:$0xff]
    %v51 = vld [vmem:[%s2 + $0x18] sm:$0xff]
    %53 = vset.pattern.permute.xlu0 0
    %54 = vperm.xlu0 %53, %v48
    %v55 = vpop.permute.xlu0 %54
    %58 = vset.pattern.permute.xlu0 0
    %59 = vperm.xlu0 %58, %v49
    %v60 = vpop.permute.xlu0 %59
    %63 = vset.pattern.permute.xlu0 0
    %64 = vperm.xlu0 %63, %v50
    %v65 = vpop.permute.xlu0 %64
    %68 = vset.pattern.permute.xlu0 0
    %69 = vperm.xlu0 %68, %v51
    %v70 = vpop.permute.xlu0 %69
    %vm72 = vcmask 261120
    %v74 = vsel %vm72, %v44, 0
    %v77 = vsel %vm72, %v45, 0
    %v80 = vsel %vm72, %v46, 0
    %v83 = vsel %vm72, %v47, 0
    %v86 = vsel %vm72, %v42, 0
    %v89 = vsel %vm72, %v43, 0
    %91 = vmatpush.xpose.msra.mxu0 0.0
    %92 = vmatpush.xpose.msra.mxu0 0.0
    %93 = vmatpush.xpose.msra.mxu0 0.0
    %94 = vmatpush.xpose.msra.mxu0 0.0
    %95 = vmatpush.xpose.msra.mxu0 0.0
    %96 = vmatpush.xpose.msra.mxu0 0.0
    %97 = vmatpush.xpose.msra.mxu0 0.0
    %98 = vmatpush.xpose.msra.mxu0 0.0
    %99 = vmatpush.xpose.msra.mxu0 0.0
    %100 = vmatpush.xpose.msra.mxu0 0.0
    %101 = vmatpush.xpose.msra.mxu0 0.0
    %102 = vmatpush.xpose.msra.mxu0 0.0
    %103 = vmatpush.xpose.msra.mxu0 0.0
    %104 = vmatpush.xpose.msra.mxu0 0.0
    %v105 = vand.u32 %v89, 4294901760
    %106 = vmatpush.xpose.msra.mxu0 %v105
    %v107 = vand.u32 %v86, 4294901760
    %108 = vmatpush.xpose.msra.mxu0 %v107
    %v109 = vand.u32 %v74, 4294901760
    %v110 = vsub.f32 %v74, %v109
    %v111 = vand.u32 %v110, 4294901760
    %v112 = vsub.f32 %v110, %v111
    %v113 = vand.u32 %v112, 4294901760
    %114 = vmatmul.f32.gmra.mxu0 %v113
    %v115 = vpop.f32.mrf.mxu0
    %v116 = vadd.f32 %v55, %v115
    %v117 = vand.u32 %v77, 4294901760
    %v118 = vsub.f32 %v77, %v117
    %v119 = vand.u32 %v118, 4294901760
    %v120 = vsub.f32 %v118, %v119
    %v121 = vand.u32 %v120, 4294901760
    %122 = vmatmul.f32.gmra.mxu0 %v121
    %v123 = vpop.f32.mrf.mxu0
    %v124 = vadd.f32 %v60, %v123
    %v125 = vand.u32 %v80, 4294901760
    %v126 = vsub.f32 %v80, %v125
    %v127 = vand.u32 %v126, 4294901760
    %v128 = vsub.f32 %v126, %v127
    %v129 = vand.u32 %v128, 4294901760
    %130 = vmatmul.f32.gmra.mxu0 %v129
    %v131 = vpop.f32.mrf.mxu0
    %v132 = vadd.f32 %v65, %v131
    %v133 = vand.u32 %v83, 4294901760
    %v134 = vsub.f32 %v83, %v133
    %v135 = vand.u32 %v134, 4294901760
    %v136 = vsub.f32 %v134, %v135
    %v137 = vand.u32 %v136, 4294901760
    %138 = vmatmul.f32.gmra.mxu0 %v137
    %v139 = vpop.f32.mrf.mxu0
    %v140 = vadd.f32 %v70, %v139
    %141 = vdwg.mxu0
    %142 = vmatpush.xpose.msra.mxu0 0.0
    %143 = vmatpush.xpose.msra.mxu0 0.0
    %144 = vmatpush.xpose.msra.mxu0 0.0
    %145 = vmatpush.xpose.msra.mxu0 0.0
    %146 = vmatpush.xpose.msra.mxu0 0.0
    %147 = vmatpush.xpose.msra.mxu0 0.0
    %148 = vmatpush.xpose.msra.mxu0 0.0
    %149 = vmatpush.xpose.msra.mxu0 0.0
    %150 = vmatpush.xpose.msra.mxu0 0.0
    %151 = vmatpush.xpose.msra.mxu0 0.0
    %152 = vmatpush.xpose.msra.mxu0 0.0
    %153 = vmatpush.xpose.msra.mxu0 0.0
    %154 = vmatpush.xpose.msra.mxu0 0.0
    %155 = vmatpush.xpose.msra.mxu0 0.0
    %v156 = vand.u32 %v89, 4294901760
    %v157 = vsub.f32 %v89, %v156
    %v158 = vand.u32 %v157, 4294901760
    %v159 = vsub.f32 %v157, %v158
    %v160 = vand.u32 %v159, 4294901760
    %161 = vmatpush.xpose.msra.mxu0 %v160
    %v162 = vand.u32 %v86, 4294901760
    %v163 = vsub.f32 %v86, %v162
    %v164 = vand.u32 %v163, 4294901760
    %v165 = vsub.f32 %v163, %v164
    %v166 = vand.u32 %v165, 4294901760
    %167 = vmatpush.xpose.msra.mxu0 %v166
    %v168 = vand.u32 %v74, 4294901760
    %169 = vmatmul.f32.gmra.mxu0 %v168
    %v170 = vpop.f32.mrf.mxu0
    %v171 = vadd.f32 %v116, %v170
    %v172 = vand.u32 %v77, 4294901760
    %173 = vmatmul.f32.gmra.mxu0 %v172
    %v174 = vpop.f32.mrf.mxu0
    %v175 = vadd.f32 %v124, %v174
    %v176 = vand.u32 %v80, 4294901760
    %177 = vmatmul.f32.gmra.mxu0 %v176
    %v178 = vpop.f32.mrf.mxu0
    %v179 = vadd.f32 %v132, %v178
    %v180 = vand.u32 %v83, 4294901760
    %181 = vmatmul.f32.gmra.mxu0 %v180
    %v182 = vpop.f32.mrf.mxu0
    %v183 = vadd.f32 %v140, %v182
    %184 = vdwg.mxu0
    %185 = vmatpush.xpose.msra.mxu0 0.0
    %186 = vmatpush.xpose.msra.mxu0 0.0
    %187 = vmatpush.xpose.msra.mxu0 0.0
    %188 = vmatpush.xpose.msra.mxu0 0.0
    %189 = vmatpush.xpose.msra.mxu0 0.0
    %190 = vmatpush.xpose.msra.mxu0 0.0
    %191 = vmatpush.xpose.msra.mxu0 0.0
    %192 = vmatpush.xpose.msra.mxu0 0.0
    %193 = vmatpush.xpose.msra.mxu0 0.0
    %194 = vmatpush.xpose.msra.mxu0 0.0
    %195 = vmatpush.xpose.msra.mxu0 0.0
    %196 = vmatpush.xpose.msra.mxu0 0.0
    %197 = vmatpush.xpose.msra.mxu0 0.0
    %198 = vmatpush.xpose.msra.mxu0 0.0
    %v199 = vand.u32 %v89, 4294901760
    %v200 = vsub.f32 %v89, %v199
    %201 = vmatpush.xpose.msra.mxu0 %v200
    %v202 = vand.u32 %v86, 4294901760
    %v203 = vsub.f32 %v86, %v202
    %204 = vmatpush.xpose.msra.mxu0 %v203
    %v205 = vand.u32 %v74, 4294901760
    %v206 = vsub.f32 %v74, %v205
    %207 = vmatmul.f32.gmra.mxu0 %v206
    %v208 = vpop.f32.mrf.mxu0
    %v209 = vadd.f32 %v171, %v208
    %v210 = vand.u32 %v77, 4294901760
    %v211 = vsub.f32 %v77, %v210
    %212 = vmatmul.f32.gmra.mxu0 %v211
    %v213 = vpop.f32.mrf.mxu0
    %v214 = vadd.f32 %v175, %v213
    %v215 = vand.u32 %v80, 4294901760
    %v216 = vsub.f32 %v80, %v215
    %217 = vmatmul.f32.gmra.mxu0 %v216
    %v218 = vpop.f32.mrf.mxu0
    %v219 = vadd.f32 %v179, %v218
    %v220 = vand.u32 %v83, 4294901760
    %v221 = vsub.f32 %v83, %v220
    %222 = vmatmul.f32.gmra.mxu0 %v221
    %v223 = vpop.f32.mrf.mxu0
    %v224 = vadd.f32 %v183, %v223
    %225 = vdwg.mxu0
    %226 = vmatpush.xpose.msra.mxu0 0.0
    %227 = vmatpush.xpose.msra.mxu0 0.0
    %228 = vmatpush.xpose.msra.mxu0 0.0
    %229 = vmatpush.xpose.msra.mxu0 0.0
    %230 = vmatpush.xpose.msra.mxu0 0.0
    %231 = vmatpush.xpose.msra.mxu0 0.0
    %232 = vmatpush.xpose.msra.mxu0 0.0
    %233 = vmatpush.xpose.msra.mxu0 0.0
    %234 = vmatpush.xpose.msra.mxu0 0.0
    %235 = vmatpush.xpose.msra.mxu0 0.0
    %236 = vmatpush.xpose.msra.mxu0 0.0
    %237 = vmatpush.xpose.msra.mxu0 0.0
    %238 = vmatpush.xpose.msra.mxu0 0.0
    %239 = vmatpush.xpose.msra.mxu0 0.0
    %v240 = vand.u32 %v89, 4294901760
    %241 = vmatpush.xpose.msra.mxu0 %v240
    %v242 = vand.u32 %v86, 4294901760
    %243 = vmatpush.xpose.msra.mxu0 %v242
    %v244 = vand.u32 %v74, 4294901760
    %v245 = vsub.f32 %v74, %v244
    %v246 = vand.u32 %v245, 4294901760
    %247 = vmatmul.f32.gmra.mxu0 %v246
    %v248 = vpop.f32.mrf.mxu0
    %v249 = vadd.f32 %v209, %v248
    %v250 = vand.u32 %v77, 4294901760
    %v251 = vsub.f32 %v77, %v250
    %v252 = vand.u32 %v251, 4294901760
    %253 = vmatmul.f32.gmra.mxu0 %v252
    %v254 = vpop.f32.mrf.mxu0
    %v255 = vadd.f32 %v214, %v254
    %v256 = vand.u32 %v80, 4294901760
    %v257 = vsub.f32 %v80, %v256
    %v258 = vand.u32 %v257, 4294901760
    %259 = vmatmul.f32.gmra.mxu0 %v258
    %v260 = vpop.f32.mrf.mxu0
    %v261 = vadd.f32 %v219, %v260
    %v262 = vand.u32 %v83, 4294901760
    %v263 = vsub.f32 %v83, %v262
    %v264 = vand.u32 %v263, 4294901760
    %265 = vmatmul.f32.gmra.mxu0 %v264
    %v266 = vpop.f32.mrf.mxu0
    %v267 = vadd.f32 %v224, %v266
    %268 = vdwg.mxu0
    %269 = vmatpush.xpose.msra.mxu0 0.0
    %270 = vmatpush.xpose.msra.mxu0 0.0
    %271 = vmatpush.xpose.msra.mxu0 0.0
    %272 = vmatpush.xpose.msra.mxu0 0.0
    %273 = vmatpush.xpose.msra.mxu0 0.0
    %274 = vmatpush.xpose.msra.mxu0 0.0
    %275 = vmatpush.xpose.msra.mxu0 0.0
    %276 = vmatpush.xpose.msra.mxu0 0.0
    %277 = vmatpush.xpose.msra.mxu0 0.0
    %278 = vmatpush.xpose.msra.mxu0 0.0
    %279 = vmatpush.xpose.msra.mxu0 0.0
    %280 = vmatpush.xpose.msra.mxu0 0.0
    %281 = vmatpush.xpose.msra.mxu0 0.0
    %282 = vmatpush.xpose.msra.mxu0 0.0
    %v283 = vand.u32 %v89, 4294901760
    %v284 = vsub.f32 %v89, %v283
    %v285 = vand.u32 %v284, 4294901760
    %286 = vmatpush.xpose.msra.mxu0 %v285
    %v287 = vand.u32 %v86, 4294901760
    %v288 = vsub.f32 %v86, %v287
    %v289 = vand.u32 %v288, 4294901760
    %290 = vmatpush.xpose.msra.mxu0 %v289
    %v291 = vand.u32 %v74, 4294901760
    %292 = vmatmul.f32.gmra.mxu0 %v291
    %v293 = vpop.f32.mrf.mxu0
    %v294 = vadd.f32 %v249, %v293
    %v295 = vand.u32 %v77, 4294901760
    %296 = vmatmul.f32.gmra.mxu0 %v295
    %v297 = vpop.f32.mrf.mxu0
    %v298 = vadd.f32 %v255, %v297
    %v299 = vand.u32 %v80, 4294901760
    %300 = vmatmul.f32.gmra.mxu0 %v299
    %v301 = vpop.f32.mrf.mxu0
    %v302 = vadd.f32 %v261, %v301
    %v303 = vand.u32 %v83, 4294901760
    %304 = vmatmul.f32.gmra.mxu0 %v303
    %v305 = vpop.f32.mrf.mxu0
    %v306 = vadd.f32 %v267, %v305
    %307 = vdwg.mxu0
    %308 = vmatpush.xpose.msra.mxu0 0.0
    %309 = vmatpush.xpose.msra.mxu0 0.0
    %310 = vmatpush.xpose.msra.mxu0 0.0
    %311 = vmatpush.xpose.msra.mxu0 0.0
    %312 = vmatpush.xpose.msra.mxu0 0.0
    %313 = vmatpush.xpose.msra.mxu0 0.0
    %314 = vmatpush.xpose.msra.mxu0 0.0
    %315 = vmatpush.xpose.msra.mxu0 0.0
    %316 = vmatpush.xpose.msra.mxu0 0.0
    %317 = vmatpush.xpose.msra.mxu0 0.0
    %318 = vmatpush.xpose.msra.mxu0 0.0
    %319 = vmatpush.xpose.msra.mxu0 0.0
    %320 = vmatpush.xpose.msra.mxu0 0.0
    %321 = vmatpush.xpose.msra.mxu0 0.0
    %v322 = vand.u32 %v89, 4294901760
    %323 = vmatpush.xpose.msra.mxu0 %v322
    %v324 = vand.u32 %v86, 4294901760
    %325 = vmatpush.xpose.msra.mxu0 %v324
    %v326 = vand.u32 %v74, 4294901760
    %327 = vmatmul.f32.gmra.mxu0 %v326
    %v328 = vpop.f32.mrf.mxu0
    %v329 = vadd.f32 %v294, %v328
    %v330 = vand.u32 %v77, 4294901760
    %331 = vmatmul.f32.gmra.mxu0 %v330
    %v332 = vpop.f32.mrf.mxu0
    %v333 = vadd.f32 %v298, %v332
    %v334 = vand.u32 %v80, 4294901760
    %335 = vmatmul.f32.gmra.mxu0 %v334
    %v336 = vpop.f32.mrf.mxu0
    %v337 = vadd.f32 %v302, %v336
    %v338 = vand.u32 %v83, 4294901760
    %339 = vmatmul.f32.gmra.mxu0 %v338
    %v340 = vpop.f32.mrf.mxu0
    %v341 = vadd.f32 %v306, %v340
    %342 = vdwg.mxu0
    %v343 = vmin.f32 %v329, 0.0
    %v344 = vmin.f32 %v333, 0.0
    %v345 = vmin.f32 %v337, 0.0
    %v346 = vmin.f32 %v341, 0.0
    %vm347 = vcmp.gt.f32.partialorder %v329, 0.0
    %vm348 = vcmp.gt.f32.partialorder %v333, 0.0
    %vm349 = vcmp.gt.f32.partialorder %v337, 0.0
    %vm350 = vcmp.gt.f32.partialorder %v341, 0.0
    %v351 = vmul.f32 %v343, 1.442695
    %v352 = vpow.pop %v351
    %v353 = vmul.f32 %v344, 1.442695
    %v354 = vpow.pop %v353
    %v355 = vmul.f32 %v345, 1.442695
    %v356 = vpow.pop %v355
    %v357 = vmul.f32 %v346, 1.442695
    %v358 = vpow.pop %v357
    %v359 = vsub.f32 %v352, 1.0
    %v360 = vsub.f32 %v354, 1.0
    %v361 = vsub.f32 %v356, 1.0
    %v362 = vsub.f32 %v358, 1.0
    %v363 = vsel %vm347, %v329, %v359
    %v364 = vsel %vm348, %v333, %v360
    %v365 = vsel %vm349, %v337, %v361
    %v366 = vsel %vm350, %v341, %v362
    %v367 = vld [vmem:[%s3] sm:$0xff]
    %v368 = vld [vmem:[%s3 + $0x8] sm:$0xff]
    %v369 = vld [vmem:[%s3 + $0x10] sm:$0xff]
    %v370 = vld [vmem:[%s3 + $0x18] sm:$0xff]
    %v371 = vld [vmem:[%s4] sm:$0xff]
    %v372 = vld [vmem:[%s4 + $0x8] sm:$0xff]
    %v373 = vld [vmem:[%s4 + $0x10] sm:$0xff]
    %v374 = vld [vmem:[%s4 + $0x18] sm:$0xff]
    %376 = vset.pattern.permute.xlu0 0
    %377 = vperm.xlu0 %376, %v371
    %v378 = vpop.permute.xlu0 %377
    %381 = vset.pattern.permute.xlu0 0
    %382 = vperm.xlu0 %381, %v372
    %v383 = vpop.permute.xlu0 %382
    %386 = vset.pattern.permute.xlu0 0
    %387 = vperm.xlu0 %386, %v373
    %v388 = vpop.permute.xlu0 %387
    %391 = vset.pattern.permute.xlu0 0
    %392 = vperm.xlu0 %391, %v374
    %v393 = vpop.permute.xlu0 %392
    %v396 = vsel %vm72, %v367, 0
    %v399 = vsel %vm72, %v368, 0
    %v402 = vsel %vm72, %v369, 0
    %v405 = vsel %vm72, %v370, 0
    %407 = vmatpush.msra.mxu0 0.0
    %408 = vmatpush.msra.mxu0 0.0
    %409 = vmatpush.msra.mxu0 0.0
    %410 = vmatpush.msra.mxu0 0.0
    %411 = vmatpush.msra.mxu0 0.0
    %412 = vmatpush.msra.mxu0 0.0
    %413 = vmatpush.msra.mxu0 0.0
    %414 = vmatpush.msra.mxu0 0.0
    %415 = vmatpush.msra.mxu0 0.0
    %416 = vmatpush.msra.mxu0 0.0
    %417 = vmatpush.msra.mxu0 0.0
    %418 = vmatpush.msra.mxu0 0.0
    %v419 = vand.u32 %v366, 4294901760
    %420 = vmatpush.msra.mxu0 %v419
    %v421 = vand.u32 %v365, 4294901760
    %422 = vmatpush.msra.mxu0 %v421
    %v423 = vand.u32 %v364, 4294901760
    %424 = vmatpush.msra.mxu0 %v423
    %v425 = vand.u32 %v363, 4294901760
    %426 = vmatpush.msra.mxu0 %v425
    %v427 = vand.u32 %v396, 4294901760
    %v428 = vsub.f32 %v396, %v427
    %v429 = vand.u32 %v428, 4294901760
    %v430 = vsub.f32 %v428, %v429
    %v431 = vand.u32 %v430, 4294901760
    %432 = vmatmul.f32.gmra.mxu0 %v431
    %v433 = vpop.f32.mrf.mxu0
    %v434 = vadd.f32 %v378, %v433
    %v435 = vand.u32 %v399, 4294901760
    %v436 = vsub.f32 %v399, %v435
    %v437 = vand.u32 %v436, 4294901760
    %v438 = vsub.f32 %v436, %v437
    %v439 = vand.u32 %v438, 4294901760
    %440 = vmatmul.f32.gmra.mxu0 %v439
    %v441 = vpop.f32.mrf.mxu0
    %v442 = vadd.f32 %v383, %v441
    %v443 = vand.u32 %v402, 4294901760
    %v444 = vsub.f32 %v402, %v443
    %v445 = vand.u32 %v444, 4294901760
    %v446 = vsub.f32 %v444, %v445
    %v447 = vand.u32 %v446, 4294901760
    %448 = vmatmul.f32.gmra.mxu0 %v447
    %v449 = vpop.f32.mrf.mxu0
    %v450 = vadd.f32 %v388, %v449
    %v451 = vand.u32 %v405, 4294901760
    %v452 = vsub.f32 %v405, %v451
    %v453 = vand.u32 %v452, 4294901760
    %v454 = vsub.f32 %v452, %v453
    %v455 = vand.u32 %v454, 4294901760
    %456 = vmatmul.f32.gmra.mxu0 %v455
    %v457 = vpop.f32.mrf.mxu0
    %v458 = vadd.f32 %v393, %v457
    %459 = vdwg.mxu0
    %460 = vmatpush.msra.mxu0 0.0
    %461 = vmatpush.msra.mxu0 0.0
    %462 = vmatpush.msra.mxu0 0.0
    %463 = vmatpush.msra.mxu0 0.0
    %464 = vmatpush.msra.mxu0 0.0
    %465 = vmatpush.msra.mxu0 0.0
    %466 = vmatpush.msra.mxu0 0.0
    %467 = vmatpush.msra.mxu0 0.0
    %468 = vmatpush.msra.mxu0 0.0
    %469 = vmatpush.msra.mxu0 0.0
    %470 = vmatpush.msra.mxu0 0.0
    %471 = vmatpush.msra.mxu0 0.0
    %v472 = vand.u32 %v366, 4294901760
    %v473 = vsub.f32 %v366, %v472
    %v474 = vand.u32 %v473, 4294901760
    %v475 = vsub.f32 %v473, %v474
    %v476 = vand.u32 %v475, 4294901760
    %477 = vmatpush.msra.mxu0 %v476
    %v478 = vand.u32 %v365, 4294901760
    %v479 = vsub.f32 %v365, %v478
    %v480 = vand.u32 %v479, 4294901760
    %v481 = vsub.f32 %v479, %v480
    %v482 = vand.u32 %v481, 4294901760
    %483 = vmatpush.msra.mxu0 %v482
    %v484 = vand.u32 %v364, 4294901760
    %v485 = vsub.f32 %v364, %v484
    %v486 = vand.u32 %v485, 4294901760
    %v487 = vsub.f32 %v485, %v486
    %v488 = vand.u32 %v487, 4294901760
    %489 = vmatpush.msra.mxu0 %v488
    %v490 = vand.u32 %v363, 4294901760
    %v491 = vsub.f32 %v363, %v490
    %v492 = vand.u32 %v491, 4294901760
    %v493 = vsub.f32 %v491, %v492
    %v494 = vand.u32 %v493, 4294901760
    %495 = vmatpush.msra.mxu0 %v494
    %v496 = vand.u32 %v396, 4294901760
    %497 = vmatmul.f32.gmra.mxu0 %v496
    %v498 = vpop.f32.mrf.mxu0
    %v499 = vadd.f32 %v434, %v498
    %v500 = vand.u32 %v399, 4294901760
    %501 = vmatmul.f32.gmra.mxu0 %v500
    %v502 = vpop.f32.mrf.mxu0
    %v503 = vadd.f32 %v442, %v502
    %v504 = vand.u32 %v402, 4294901760
    %505 = vmatmul.f32.gmra.mxu0 %v504
    %v506 = vpop.f32.mrf.mxu0
    %v507 = vadd.f32 %v450, %v506
    %v508 = vand.u32 %v405, 4294901760
    %509 = vmatmul.f32.gmra.mxu0 %v508
    %v510 = vpop.f32.mrf.mxu0
    %v511 = vadd.f32 %v458, %v510
    %512 = vdwg.mxu0
    %513 = vmatpush.msra.mxu0 0.0
    %514 = vmatpush.msra.mxu0 0.0
    %515 = vmatpush.msra.mxu0 0.0
    %516 = vmatpush.msra.mxu0 0.0
    %517 = vmatpush.msra.mxu0 0.0
    %518 = vmatpush.msra.mxu0 0.0
    %519 = vmatpush.msra.mxu0 0.0
    %520 = vmatpush.msra.mxu0 0.0
    %521 = vmatpush.msra.mxu0 0.0
    %522 = vmatpush.msra.mxu0 0.0
    %523 = vmatpush.msra.mxu0 0.0
    %524 = vmatpush.msra.mxu0 0.0
    %v525 = vand.u32 %v366, 4294901760
    %v526 = vsub.f32 %v366, %v525
    %527 = vmatpush.msra.mxu0 %v526
    %v528 = vand.u32 %v365, 4294901760
    %v529 = vsub.f32 %v365, %v528
    %530 = vmatpush.msra.mxu0 %v529
    %v531 = vand.u32 %v364, 4294901760
    %v532 = vsub.f32 %v364, %v531
    %533 = vmatpush.msra.mxu0 %v532
    %v534 = vand.u32 %v363, 4294901760
    %v535 = vsub.f32 %v363, %v534
    %536 = vmatpush.msra.mxu0 %v535
    %v537 = vand.u32 %v396, 4294901760
    %v538 = vsub.f32 %v396, %v537
    %539 = vmatmul.f32.gmra.mxu0 %v538
    %v540 = vpop.f32.mrf.mxu0
    %v541 = vadd.f32 %v499, %v540
    %v542 = vand.u32 %v399, 4294901760
    %v543 = vsub.f32 %v399, %v542
    %544 = vmatmul.f32.gmra.mxu0 %v543
    %v545 = vpop.f32.mrf.mxu0
    %v546 = vadd.f32 %v503, %v545
    %v547 = vand.u32 %v402, 4294901760
    %v548 = vsub.f32 %v402, %v547
    %549 = vmatmul.f32.gmra.mxu0 %v548
    %v550 = vpop.f32.mrf.mxu0
    %v551 = vadd.f32 %v507, %v550
    %v552 = vand.u32 %v405, 4294901760
    %v553 = vsub.f32 %v405, %v552
    %554 = vmatmul.f32.gmra.mxu0 %v553
    %v555 = vpop.f32.mrf.mxu0
    %v556 = vadd.f32 %v511, %v555
    %557 = vdwg.mxu0
    %558 = vmatpush.msra.mxu0 0.0
    %559 = vmatpush.msra.mxu0 0.0
    %560 = vmatpush.msra.mxu0 0.0
    %561 = vmatpush.msra.mxu0 0.0
    %562 = vmatpush.msra.mxu0 0.0
    %563 = vmatpush.msra.mxu0 0.0
    %564 = vmatpush.msra.mxu0 0.0
    %565 = vmatpush.msra.mxu0 0.0
    %566 = vmatpush.msra.mxu0 0.0
    %567 = vmatpush.msra.mxu0 0.0
    %568 = vmatpush.msra.mxu0 0.0
    %569 = vmatpush.msra.mxu0 0.0
    %v570 = vand.u32 %v366, 4294901760
    %571 = vmatpush.msra.mxu0 %v570
    %v572 = vand.u32 %v365, 4294901760
    %573 = vmatpush.msra.mxu0 %v572
    %v574 = vand.u32 %v364, 4294901760
    %575 = vmatpush.msra.mxu0 %v574
    %v576 = vand.u32 %v363, 4294901760
    %577 = vmatpush.msra.mxu0 %v576
    %v578 = vand.u32 %v396, 4294901760
    %v579 = vsub.f32 %v396, %v578
    %v580 = vand.u32 %v579, 4294901760
    %581 = vmatmul.f32.gmra.mxu0 %v580
    %v582 = vpop.f32.mrf.mxu0
    %v583 = vadd.f32 %v541, %v582
    %v584 = vand.u32 %v399, 4294901760
    %v585 = vsub.f32 %v399, %v584
    %v586 = vand.u32 %v585, 4294901760
    %587 = vmatmul.f32.gmra.mxu0 %v586
    %v588 = vpop.f32.mrf.mxu0
    %v589 = vadd.f32 %v546, %v588
    %v590 = vand.u32 %v402, 4294901760
    %v591 = vsub.f32 %v402, %v590
    %v592 = vand.u32 %v591, 4294901760
    %593 = vmatmul.f32.gmra.mxu0 %v592
    %v594 = vpop.f32.mrf.mxu0
    %v595 = vadd.f32 %v551, %v594
    %v596 = vand.u32 %v405, 4294901760
    %v597 = vsub.f32 %v405, %v596
    %v598 = vand.u32 %v597, 4294901760
    %599 = vmatmul.f32.gmra.mxu0 %v598
    %v600 = vpop.f32.mrf.mxu0
    %v601 = vadd.f32 %v556, %v600
    %602 = vdwg.mxu0
    %603 = vmatpush.msra.mxu0 0.0
    %604 = vmatpush.msra.mxu0 0.0
    %605 = vmatpush.msra.mxu0 0.0
    %606 = vmatpush.msra.mxu0 0.0
    %607 = vmatpush.msra.mxu0 0.0
    %608 = vmatpush.msra.mxu0 0.0
    %609 = vmatpush.msra.mxu0 0.0
    %610 = vmatpush.msra.mxu0 0.0
    %611 = vmatpush.msra.mxu0 0.0
    %612 = vmatpush.msra.mxu0 0.0
    %613 = vmatpush.msra.mxu0 0.0
    %614 = vmatpush.msra.mxu0 0.0
    %v615 = vand.u32 %v366, 4294901760
    %v616 = vsub.f32 %v366, %v615
    %v617 = vand.u32 %v616, 4294901760
    %618 = vmatpush.msra.mxu0 %v617
    %v619 = vand.u32 %v365, 4294901760
    %v620 = vsub.f32 %v365, %v619
    %v621 = vand.u32 %v620, 4294901760
    %622 = vmatpush.msra.mxu0 %v621
    %v623 = vand.u32 %v364, 4294901760
    %v624 = vsub.f32 %v364, %v623
    %v625 = vand.u32 %v624, 4294901760
    %626 = vmatpush.msra.mxu0 %v625
    %v627 = vand.u32 %v363, 4294901760
    %v628 = vsub.f32 %v363, %v627
    %v629 = vand.u32 %v628, 4294901760
    %630 = vmatpush.msra.mxu0 %v629
    %v631 = vand.u32 %v396, 4294901760
    %632 = vmatmul.f32.gmra.mxu0 %v631
    %v633 = vpop.f32.mrf.mxu0
    %v634 = vadd.f32 %v583, %v633
    %v635 = vand.u32 %v399, 4294901760
    %636 = vmatmul.f32.gmra.mxu0 %v635
    %v637 = vpop.f32.mrf.mxu0
    %v638 = vadd.f32 %v589, %v637
    %v639 = vand.u32 %v402, 4294901760
    %640 = vmatmul.f32.gmra.mxu0 %v639
    %v641 = vpop.f32.mrf.mxu0
    %v642 = vadd.f32 %v595, %v641
    %v643 = vand.u32 %v405, 4294901760
    %644 = vmatmul.f32.gmra.mxu0 %v643
    %v645 = vpop.f32.mrf.mxu0
    %v646 = vadd.f32 %v601, %v645
    %647 = vdwg.mxu0
    %648 = vmatpush.msra.mxu0 0.0
    %649 = vmatpush.msra.mxu0 0.0
    %650 = vmatpush.msra.mxu0 0.0
    %651 = vmatpush.msra.mxu0 0.0
    %652 = vmatpush.msra.mxu0 0.0
    %653 = vmatpush.msra.mxu0 0.0
    %654 = vmatpush.msra.mxu0 0.0
    %655 = vmatpush.msra.mxu0 0.0
    %656 = vmatpush.msra.mxu0 0.0
    %657 = vmatpush.msra.mxu0 0.0
    %658 = vmatpush.msra.mxu0 0.0
    %659 = vmatpush.msra.mxu0 0.0
    %v660 = vand.u32 %v366, 4294901760
    %661 = vmatpush.msra.mxu0 %v660
    %v662 = vand.u32 %v365, 4294901760
    %663 = vmatpush.msra.mxu0 %v662
    %v664 = vand.u32 %v364, 4294901760
    %665 = vmatpush.msra.mxu0 %v664
    %v666 = vand.u32 %v363, 4294901760
    %667 = vmatpush.msra.mxu0 %v666
    %v668 = vand.u32 %v396, 4294901760
    %669 = vmatmul.f32.gmra.mxu0 %v668
    %v670 = vpop.f32.mrf.mxu0
    %v671 = vadd.f32 %v634, %v670
    %v672 = vand.u32 %v399, 4294901760
    %673 = vmatmul.f32.gmra.mxu0 %v672
    %v674 = vpop.f32.mrf.mxu0
    %v675 = vadd.f32 %v638, %v674
    %v676 = vand.u32 %v402, 4294901760
    %677 = vmatmul.f32.gmra.mxu0 %v676
    %v678 = vpop.f32.mrf.mxu0
    %v679 = vadd.f32 %v642, %v678
    %v680 = vand.u32 %v405, 4294901760
    %681 = vmatmul.f32.gmra.mxu0 %v680
    %v682 = vpop.f32.mrf.mxu0
    %v683 = vadd.f32 %v646, %v682
    %684 = vdwg.mxu0
    %v685 = vmin.f32 %v671, 0.0
    %v686 = vmin.f32 %v675, 0.0
    %v687 = vmin.f32 %v679, 0.0
    %v688 = vmin.f32 %v683, 0.0
    %vm689 = vcmp.gt.f32.partialorder %v671, 0.0
    %vm690 = vcmp.gt.f32.partialorder %v675, 0.0
    %vm691 = vcmp.gt.f32.partialorder %v679, 0.0
    %vm692 = vcmp.gt.f32.partialorder %v683, 0.0
    %v693 = vmul.f32 %v685, 1.442695
    %v694 = vpow.pop %v693
    %v695 = vmul.f32 %v686, 1.442695
    %v696 = vpow.pop %v695
    %v697 = vmul.f32 %v687, 1.442695
    %v698 = vpow.pop %v697
    %v699 = vmul.f32 %v688, 1.442695
    %v700 = vpow.pop %v699
    %v701 = vsub.f32 %v694, 1.0
    %v702 = vsub.f32 %v696, 1.0
    %v703 = vsub.f32 %v698, 1.0
    %v704 = vsub.f32 %v700, 1.0
    %v705 = vsel %vm689, %v671, %v701
    %v706 = vsel %vm690, %v675, %v702
    %v707 = vsel %vm691, %v679, %v703
    %v708 = vsel %vm692, %v683, %v704
    %v709 = vld [vmem:[%s5] sm:$0x3]
    %v710 = vld [vmem:[%s6] sm:$0x3]
    %712 = vset.pattern.permute.xlu0 0
    %713 = vperm.xlu0 %712, %v710
    %v714 = vpop.permute.xlu0 %713
    %v717 = vsel %vm72, %v709, 0
    %719 = vmatpush.msra.mxu0 0.0
    %720 = vmatpush.msra.mxu0 0.0
    %721 = vmatpush.msra.mxu0 0.0
    %722 = vmatpush.msra.mxu0 0.0
    %723 = vmatpush.msra.mxu0 0.0
    %724 = vmatpush.msra.mxu0 0.0
    %725 = vmatpush.msra.mxu0 0.0
    %726 = vmatpush.msra.mxu0 0.0
    %727 = vmatpush.msra.mxu0 0.0
    %728 = vmatpush.msra.mxu0 0.0
    %729 = vmatpush.msra.mxu0 0.0
    %730 = vmatpush.msra.mxu0 0.0
    %v731 = vand.u32 %v708, 4294901760
    %732 = vmatpush.msra.mxu0 %v731
    %v733 = vand.u32 %v707, 4294901760
    %734 = vmatpush.msra.mxu0 %v733
    %v735 = vand.u32 %v706, 4294901760
    %736 = vmatpush.msra.mxu0 %v735
    %v737 = vand.u32 %v705, 4294901760
    %738 = vmatpush.msra.mxu0 %v737
    %v739 = vand.u32 %v717, 4294901760
    %v740 = vsub.f32 %v717, %v739
    %v741 = vand.u32 %v740, 4294901760
    %v742 = vsub.f32 %v740, %v741
    %v743 = vand.u32 %v742, 4294901760
    %744 = vmatmul.f32.gmra.mxu0 %v743
    %v745 = vpop.f32.mrf.mxu0
    %v746 = vadd.f32 %v714, %v745
    %747 = vdwg.mxu0
    %748 = vmatpush.msra.mxu0 0.0
    %749 = vmatpush.msra.mxu0 0.0
    %750 = vmatpush.msra.mxu0 0.0
    %751 = vmatpush.msra.mxu0 0.0
    %752 = vmatpush.msra.mxu0 0.0
    %753 = vmatpush.msra.mxu0 0.0
    %754 = vmatpush.msra.mxu0 0.0
    %755 = vmatpush.msra.mxu0 0.0
    %756 = vmatpush.msra.mxu0 0.0
    %757 = vmatpush.msra.mxu0 0.0
    %758 = vmatpush.msra.mxu0 0.0
    %759 = vmatpush.msra.mxu0 0.0
    %v760 = vand.u32 %v708, 4294901760
    %v761 = vsub.f32 %v708, %v760
    %v762 = vand.u32 %v761, 4294901760
    %v763 = vsub.f32 %v761, %v762
    %v764 = vand.u32 %v763, 4294901760
    %765 = vmatpush.msra.mxu0 %v764
    %v766 = vand.u32 %v707, 4294901760
    %v767 = vsub.f32 %v707, %v766
    %v768 = vand.u32 %v767, 4294901760
    %v769 = vsub.f32 %v767, %v768
    %v770 = vand.u32 %v769, 4294901760
    %771 = vmatpush.msra.mxu0 %v770
    %v772 = vand.u32 %v706, 4294901760
    %v773 = vsub.f32 %v706, %v772
    %v774 = vand.u32 %v773, 4294901760
    %v775 = vsub.f32 %v773, %v774
    %v776 = vand.u32 %v775, 4294901760
    %777 = vmatpush.msra.mxu0 %v776
    %v778 = vand.u32 %v705, 4294901760
    %v779 = vsub.f32 %v705, %v778
    %v780 = vand.u32 %v779, 4294901760
    %v781 = vsub.f32 %v779, %v780
    %v782 = vand.u32 %v781, 4294901760
    %783 = vmatpush.msra.mxu0 %v782
    %v784 = vand.u32 %v717, 4294901760
    %785 = vmatmul.f32.gmra.mxu0 %v784
    %v786 = vpop.f32.mrf.mxu0
    %v787 = vadd.f32 %v746, %v786
    %788 = vdwg.mxu0
    %789 = vmatpush.msra.mxu0 0.0
    %790 = vmatpush.msra.mxu0 0.0
    %791 = vmatpush.msra.mxu0 0.0
    %792 = vmatpush.msra.mxu0 0.0
    %793 = vmatpush.msra.mxu0 0.0
    %794 = vmatpush.msra.mxu0 0.0
    %795 = vmatpush.msra.mxu0 0.0
    %796 = vmatpush.msra.mxu0 0.0
    %797 = vmatpush.msra.mxu0 0.0
    %798 = vmatpush.msra.mxu0 0.0
    %799 = vmatpush.msra.mxu0 0.0
    %800 = vmatpush.msra.mxu0 0.0
    %v801 = vand.u32 %v708, 4294901760
    %v802 = vsub.f32 %v708, %v801
    %803 = vmatpush.msra.mxu0 %v802
    %v804 = vand.u32 %v707, 4294901760
    %v805 = vsub.f32 %v707, %v804
    %806 = vmatpush.msra.mxu0 %v805
    %v807 = vand.u32 %v706, 4294901760
    %v808 = vsub.f32 %v706, %v807
    %809 = vmatpush.msra.mxu0 %v808
    %v810 = vand.u32 %v705, 4294901760
    %v811 = vsub.f32 %v705, %v810
    %812 = vmatpush.msra.mxu0 %v811
    %v813 = vand.u32 %v717, 4294901760
    %v814 = vsub.f32 %v717, %v813
    %815 = vmatmul.f32.gmra.mxu0 %v814
    %v816 = vpop.f32.mrf.mxu0
    %v817 = vadd.f32 %v787, %v816
    %818 = vdwg.mxu0
    %819 = vmatpush.msra.mxu0 0.0
    %820 = vmatpush.msra.mxu0 0.0
    %821 = vmatpush.msra.mxu0 0.0
    %822 = vmatpush.msra.mxu0 0.0
    %823 = vmatpush.msra.mxu0 0.0
    %824 = vmatpush.msra.mxu0 0.0
    %825 = vmatpush.msra.mxu0 0.0
    %826 = vmatpush.msra.mxu0 0.0
    %827 = vmatpush.msra.mxu0 0.0
    %828 = vmatpush.msra.mxu0 0.0
    %829 = vmatpush.msra.mxu0 0.0
    %830 = vmatpush.msra.mxu0 0.0
    %v831 = vand.u32 %v708, 4294901760
    %832 = vmatpush.msra.mxu0 %v831
    %v833 = vand.u32 %v707, 4294901760
    %834 = vmatpush.msra.mxu0 %v833
    %v835 = vand.u32 %v706, 4294901760
    %836 = vmatpush.msra.mxu0 %v835
    %v837 = vand.u32 %v705, 4294901760
    %838 = vmatpush.msra.mxu0 %v837
    %v839 = vand.u32 %v717, 4294901760
    %v840 = vsub.f32 %v717, %v839
    %v841 = vand.u32 %v840, 4294901760
    %842 = vmatmul.f32.gmra.mxu0 %v841
    %v843 = vpop.f32.mrf.mxu0
    %v844 = vadd.f32 %v817, %v843
    %845 = vdwg.mxu0
    %846 = vmatpush.msra.mxu0 0.0
    %847 = vmatpush.msra.mxu0 0.0
    %848 = vmatpush.msra.mxu0 0.0
    %849 = vmatpush.msra.mxu0 0.0
    %850 = vmatpush.msra.mxu0 0.0
    %851 = vmatpush.msra.mxu0 0.0
    %852 = vmatpush.msra.mxu0 0.0
    %853 = vmatpush.msra.mxu0 0.0
    %854 = vmatpush.msra.mxu0 0.0
    %855 = vmatpush.msra.mxu0 0.0
    %856 = vmatpush.msra.mxu0 0.0
    %857 = vmatpush.msra.mxu0 0.0
    %v858 = vand.u32 %v708, 4294901760
    %v859 = vsub.f32 %v708, %v858
    %v860 = vand.u32 %v859, 4294901760
    %861 = vmatpush.msra.mxu0 %v860
    %v862 = vand.u32 %v707, 4294901760
    %v863 = vsub.f32 %v707, %v862
    %v864 = vand.u32 %v863, 4294901760
    %865 = vmatpush.msra.mxu0 %v864
    %v866 = vand.u32 %v706, 4294901760
    %v867 = vsub.f32 %v706, %v866
    %v868 = vand.u32 %v867, 4294901760
    %869 = vmatpush.msra.mxu0 %v868
    %v870 = vand.u32 %v705, 4294901760
    %v871 = vsub.f32 %v705, %v870
    %v872 = vand.u32 %v871, 4294901760
    %873 = vmatpush.msra.mxu0 %v872
    %v874 = vand.u32 %v717, 4294901760
    %875 = vmatmul.f32.gmra.mxu0 %v874
    %v876 = vpop.f32.mrf.mxu0
    %v877 = vadd.f32 %v844, %v876
    %878 = vdwg.mxu0
    %879 = vmatpush.msra.mxu0 0.0
    %880 = vmatpush.msra.mxu0 0.0
    %881 = vmatpush.msra.mxu0 0.0
    %882 = vmatpush.msra.mxu0 0.0
    %883 = vmatpush.msra.mxu0 0.0
    %884 = vmatpush.msra.mxu0 0.0
    %885 = vmatpush.msra.mxu0 0.0
    %886 = vmatpush.msra.mxu0 0.0
    %887 = vmatpush.msra.mxu0 0.0
    %888 = vmatpush.msra.mxu0 0.0
    %889 = vmatpush.msra.mxu0 0.0
    %890 = vmatpush.msra.mxu0 0.0
    %v891 = vand.u32 %v708, 4294901760
    %892 = vmatpush.msra.mxu0 %v891
    %v893 = vand.u32 %v707, 4294901760
    %894 = vmatpush.msra.mxu0 %v893
    %v895 = vand.u32 %v706, 4294901760
    %896 = vmatpush.msra.mxu0 %v895
    %v897 = vand.u32 %v705, 4294901760
    %898 = vmatpush.msra.mxu0 %v897
    %v899 = vand.u32 %v717, 4294901760
    %900 = vmatmul.f32.gmra.mxu0 %v899
    %v901 = vpop.f32.mrf.mxu0
    %v902 = vadd.f32 %v877, %v901
    %903 = vdwg.mxu0
    %vm904 = vcmask 122880
    %905 = vst.msk [vmem:[%s7] sm:$0x1] %vm904, %v902
    %v906 = vadd.f32 %v902, 0.01
    %v907 = vmax.f32 %v906, 0.0
    %v908 = vand.u32 2147483647, %v906
    %v909 = vsub.f32 0.0, %v908
    %v910 = vmul.f32 %v909, 1.442695
    %v911 = vpow.pop %v910
    %v912 = vadd.f32 %v911, 1.0
    %v913 = vlog2.pop %v912
    %v914 = vmul.f32 %v913, 0.6931472
    %v915 = vadd.f32 %v907, %v914
    %v916 = vadd.f32 %v915, 1e-05
    %vm917 = vcmask 123905
    %918 = vst.msk [vmem:[%s7] sm:$0x2] %vm917, %v916
    // Predicated region
    $region34: #{value_model_forward.1} parent=1 // pred_check
      _
    $region35: #{value_model_forward.1} parent=1 // pred_check_branch
      %920 = sbr.rel (0) target = $region37
    $region36: #{value_model_forward.1} parent=1 // pred_region
      _
    $region37: #{value_model_forward.1} parent=1 // pred_fallthru
      _
    // Predicated region
    $region38: #{value_model_forward.1} parent=1 // pred_check
      _
    $region39: #{value_model_forward.1} parent=1 // pred_check_branch
      %922 = sbr.rel (0) target = $region41
    $region40: #{value_model_forward.1} parent=1 // pred_region
      _
    $region41: #{value_model_forward.1} parent=1 // pred_fallthru
      _
    %923 = vsyncpa [#allocation3], 1

</llo_original>
